<compile_context>
chip_gen: v7x
topology: tpu7x:2x2x1
jax: 0.10.0
libtpu: 0.0.40
codegen_flags: <defaults>
</compile_context>

<pallas_src>
import functools

import jax
import jax.numpy as jnp
from jax import lax
from jax.experimental import pallas as pl
from jax.experimental.pallas import tpu as pltpu


LEAKY_SLOPE = 0.01  # nn.LeakyReLU() default negative_slope


def _round_up(x, m):
    return (x + m - 1) // m * m


def _choose_tile_hw(hw, k_pad, desired=512):
    """Pick the lane-axis tile over H_out*W_out (multiple of 128)."""
    # Keep the double-buffered bf16 patch stream comfortably under the default
    # scoped-VMEM limit on all generations (16 MiB on v5e is the tightest).
    budget_bytes = 6 * 1024 * 1024
    per_lane_bytes = 2 * 2 * k_pad                  # bf16 * 2 pipeline buffers
    cap = max(128, (budget_bytes // per_lane_bytes) // 128 * 128)
    t = max(128, (min(desired, cap) // 128) * 128)
    return min(t, _round_up(hw, 128))


def _conv_tile_kernel(w_ref, b_ref, p_ref, o_ref):
    """One tile: out[O, t_hw] = leaky_relu(W[O, K] @ P[K, t_hw] + b[O, 1])."""
    acc = jnp.dot(w_ref[...], p_ref[...], preferred_element_type=jnp.float32)
    acc = acc + b_ref[...]                          # (O, 1) broadcasts over lanes
    o_ref[...] = jnp.where(acc >= 0.0, acc, LEAKY_SLOPE * acc).astype(o_ref.dtype)


@functools.partial(jax.jit, static_argnames=("stride", "tile_hw"))
def cnn_halver_forward(image_nchw, weight, bias, *, stride=2, tile_hw=512):
    """Forward pass of CNNHalver.

    image_nchw : [N, C, H, W]   float32
    weight     : [O, C, KH, KW] float32  (PyTorch Conv2d layout)
    bias       : [O]            float32
    returns    : [N, O, H_out, W_out] float32
    """
    N, C, H, W = image_nchw.shape
    O, Cw, KH, KW = weight.shape
    assert C == Cw
    pad = KH // 2 - 1
    assert pad >= 0, "kernel_size must be >= 2 (PyTorch would reject negative padding)"

    H_out = (H + 2 * pad - KH) // stride + 1
    W_out = (W + 2 * pad - KW) // stride + 1
    HW = H_out * W_out
    K = C * KH * KW

    # ---- glue: tap-sliced patch tensor, stays in NCHW (no transposes) -----
    x = jnp.pad(image_nchw, ((0, 0), (0, 0), (pad, pad), (pad, pad)))
    taps = []
    for kh in range(KH):
        for kw in range(KW):
            taps.append(
                lax.slice(
                    x,
                    (0, 0, kh, kw),
                    (N, C, kh + stride * (H_out - 1) + 1, kw + stride * (W_out - 1) + 1),
                    (1, 1, stride, stride),
                )  # [N, C, H_out, W_out]
            )
    p = jnp.stack(taps, axis=2)                     # [N, C, KH*KW, Ho, Wo]
    p = p.reshape(N, K, HW)                         # K ordering = (c, kh, kw)
    w2d = weight.reshape(O, K)                      # same (c, kh, kw) ordering

    # ---- pad to TPU-friendly tile boundaries -------------------------------
    k_pad = _round_up(K, 8)
    t_hw = _choose_tile_hw(HW, k_pad, desired=tile_hw)
    hw_pad = _round_up(HW, t_hw)
    p = jnp.pad(p, ((0, 0), (0, k_pad - K), (0, hw_pad - HW)))
    w2d = jnp.pad(w2d, ((0, 0), (0, k_pad - K)))

    # stream the big operands in bf16; accumulation stays f32 inside the kernel
    p = p.astype(jnp.bfloat16)
    w2d = w2d.astype(jnp.bfloat16)
    b2d = bias.reshape(O, 1).astype(jnp.float32)

    grid = (N, hw_pad // t_hw)

    out = pl.pallas_call(
        _conv_tile_kernel,
        out_shape=jax.ShapeDtypeStruct((N, O, hw_pad), jnp.float32),
        grid_spec=pltpu.PrefetchScalarGridSpec(
            num_scalar_prefetch=0,
            grid=grid,
            in_specs=[
                pl.BlockSpec((O, k_pad), lambda n, m: (0, 0)),          # VMEM-resident
                pl.BlockSpec((O, 1), lambda n, m: (0, 0)),              # VMEM-resident
                pl.BlockSpec((None, k_pad, t_hw), lambda n, m: (n, 0, m)),
            ],
            out_specs=pl.BlockSpec((None, O, t_hw), lambda n, m: (n, 0, m)),
        ),
        compiler_params=pltpu.CompilerParams(
            dimension_semantics=("parallel", "parallel"),
        ),
    )(w2d, b2d, p)

    # output is already channel-major: [N, O, Ho*Wo] -> NCHW, just slice + reshape
    return out[:, :, :HW].reshape(N, O, H_out, W_out)


def _reference_forward(image_nchw, weight, bias, *, stride=2):
    """Pure-JAX reference (lax.conv) for correctness checking."""
    KH = weight.shape[2]
    pad = KH // 2 - 1
    y = lax.conv_general_dilated(
        image_nchw, weight,
        window_strides=(stride, stride),
        padding=((pad, pad), (pad, pad)),
        dimension_numbers=("NCHW", "OIHW", "NCHW"),
        precision=lax.Precision.HIGHEST,
    )
    y = y + bias.reshape(1, -1, 1, 1)
    return jnp.where(y >= 0.0, y, LEAKY_SLOPE * y)


if __name__ == "__main__":
    # small shapes consistent with the module: Conv2d(4 -> 8, k=4, stride=2, pad=1)
    N, C, H, W = 2, 4, 16, 16
    O, KS = 8, 4

    key = jax.random.PRNGKey(0)
    k_img, k_w, k_b = jax.random.split(key, 3)
    image = jax.random.normal(k_img, (N, C, H, W), dtype=jnp.float32)
    fan_in = C * KS * KS
    bound = 1.0 / (fan_in ** 0.5)
    weight = jax.random.uniform(k_w, (O, C, KS, KS), jnp.float32, -bound, bound)
    bias = jax.random.uniform(k_b, (O,), jnp.float32, -bound, bound)

    out = jax.block_until_ready(cnn_halver_forward(image, weight, bias))

    # Reference uses the same bf16-rounded streamed operands the kernel sees
    # (f32 accumulation in both), so tolerances stay tight.
    img_r = image.astype(jnp.bfloat16).astype(jnp.float32)
    w_r = weight.astype(jnp.bfloat16).astype(jnp.float32)
    ref = jax.block_until_ready(_reference_forward(img_r, w_r, bias))

    assert out.shape == (N, O, H // 2, W // 2), out.shape
    assert jnp.allclose(out, ref, atol=1e-3, rtol=1e-3), "mismatch vs reference"

    print("KERNEL_OK")
</pallas_src>

<mosaic_0001>
module attributes {stable_mosaic.version = 11 : i64} {
  func.func @_conv_tile_kernel(%arg0: i32, %arg1: i32, %arg2: memref<8x64xbf16, #tpu.memory_space<vmem>>, %arg3: memref<8x1xf32, #tpu.memory_space<vmem>>, %arg4: memref<1x64x128xbf16, #tpu.memory_space<vmem>>, %arg5: memref<1x8x128xf32, #tpu.memory_space<vmem>>) attributes {dimension_semantics = [#tpu.dimension_semantics<parallel>, #tpu.dimension_semantics<parallel>], iteration_bounds = array<i64: 2, 1>, scalar_prefetch = 0 : i64, scratch_operands = 0 : i64, tpu.core_type = #tpu.core_type<tc>, window_params = [{pipeline_mode = #tpu.pipeline_mode<synchronous>, transform_indices = @transform_0, window_bounds = array<i64: 8, 64>}, {pipeline_mode = #tpu.pipeline_mode<synchronous>, transform_indices = @transform_1, window_bounds = array<i64: 8, 1>}, {transform_indices = @transform_2, window_bounds = array<i64: 1, 64, 128>}, {transform_indices = @transform_3, window_bounds = array<i64: 1, 8, 128>}]} {
    %c0 = arith.constant 0 : index
    %c0_0 = arith.constant 0 : index
    %0 = vector.load %arg2[%c0, %c0_0] : memref<8x64xbf16, #tpu.memory_space<vmem>>, vector<8x64xbf16>
    %c0_1 = arith.constant 0 : index
    %c0_2 = arith.constant 0 : index
    %c0_3 = arith.constant 0 : index
    %1 = vector.load %arg4[%c0_1, %c0_2, %c0_3] : memref<1x64x128xbf16, #tpu.memory_space<vmem>>, vector<1x64x128xbf16>
    %2 = vector.shape_cast %1 : vector<1x64x128xbf16> to vector<64x128xbf16>
    %cst = arith.constant dense<0.000000e+00> : vector<8x128xf32>
    %3 = tpu.matmul %0, %2, %cst {dimension_numbers = #tpu.dot_dimension_numbers<[1], [0], [0], [1], [0, 0, 1, 1], [], []>} : vector<8x64xbf16>, vector<64x128xbf16>, vector<8x128xf32> -> vector<8x128xf32>
    %c0_4 = arith.constant 0 : index
    %c0_5 = arith.constant 0 : index
    %4 = vector.load %arg3[%c0_4, %c0_5] : memref<8x1xf32, #tpu.memory_space<vmem>>, vector<8x1xf32>
    %5 = vector.broadcast %4 : vector<8x1xf32> to vector<8x128xf32>
    %6 = arith.addf %3, %5 : vector<8x128xf32>
    %cst_6 = arith.constant 0.000000e+00 : f32
    %7 = vector.broadcast %cst_6 : f32 to vector<8x128xf32>
    %8 = arith.cmpf oge, %6, %7 : vector<8x128xf32>
    %cst_7 = arith.constant 0.00999999977 : f32
    %9 = vector.broadcast %cst_7 : f32 to vector<8x128xf32>
    %10 = arith.mulf %9, %6 : vector<8x128xf32>
    %11 = arith.select %8, %6, %10 : vector<8x128xi1>, vector<8x128xf32>
    %c0_8 = arith.constant 0 : index
    %c0_9 = arith.constant 0 : index
    %c0_10 = arith.constant 0 : index
    %12 = vector.load %arg5[%c0_8, %c0_9, %c0_10] : memref<1x8x128xf32, #tpu.memory_space<vmem>>, vector<1x8x128xf32>
    %13 = vector.shape_cast %12 : vector<1x8x128xf32> to vector<8x128xf32>
    %14 = vector.shape_cast %11 : vector<8x128xf32> to vector<1x8x128xf32>
    tpu.vector_store %arg5[%c0_8, %c0_9, %c0_10], %14 {strides = array<i32>} : memref<1x8x128xf32, #tpu.memory_space<vmem>>, vector<1x8x128xf32>,
    return
  }
  func.func @transform_0(%arg0: i32, %arg1: i32) -> (i32, i32) {
    %c0_i32 = arith.constant 0 : i32
    %c0_i32_0 = arith.constant 0 : i32
    %c0_i32_1 = arith.constant 0 : i32
    return %c0_i32, %c0_i32_0 : i32, i32
  }
  func.func @transform_1(%arg0: i32, %arg1: i32) -> (i32, i32) {
    %c0_i32 = arith.constant 0 : i32
    %c0_i32_0 = arith.constant 0 : i32
    %c0_i32_1 = arith.constant 0 : i32
    return %c0_i32, %c0_i32_0 : i32, i32
  }
  func.func @transform_2(%arg0: i32, %arg1: i32) -> (i32, i32, i32) {
    %c0_i32 = arith.constant 0 : i32
    %c0_i32_0 = arith.constant 0 : i32
    return %arg0, %c0_i32, %arg1 : i32, i32, i32
  }
  func.func @transform_3(%arg0: i32, %arg1: i32) -> (i32, i32, i32) {
    %c0_i32 = arith.constant 0 : i32
    %c0_i32_0 = arith.constant 0 : i32
    return %arg0, %c0_i32, %arg1 : i32, i32, i32
  }
}

</mosaic_0001>

<llo_original>
// kernel: cnn_halver_forward.1
$region0: #{cnn_halver_forward.1}
  #allocation0 [shape = 'u32[]', space=smem, size = 0x4, offset = 0x4, fixed_abs, tag = 'smem constant byte address 0x4 - core index']
  #allocation1 [shape = 'u32[144,128]{1,0:T(1,128)}', space=vmem, size = 0x12000, scoped, tag = 'internal scratch']
  %s0 = inlined_call_operand.vmem [shape: bf16[8,64], index: 0, kind: input, shape index: {}]
  %s1 = inlined_call_operand.vmem [shape: f32[8,1], index: 1, kind: input, shape index: {}]
  %s2 = inlined_call_operand.vmem [shape: bf16[2,64,128], index: 2, kind: input, shape index: {}]
  %s3 = inlined_call_operand.vmem [shape: f32[2,8,128], index: 3, kind: output, shape index: {}]
  %s4 = sld [smem:[#allocation0]]
  $region45: #{cnn_halver_forward.1} parent=0
    _
  %s6 = ssub.s32 1, %s4
  %s7 = scalar_select 0, %s6, %s4
  loop: start=0, step=1, limit=4
  $region2: #{cnn_halver_forward.1} parent=0 // loop_pre_header
    _
  $region3: #{cnn_halver_forward.1} parent=0 // loop_header
    %s9 = sphi 0, %s13
    %p10 = scmp.ge.s32.totalorder %s9, 4
    %s16 = sphi 0, %s28
    %s17 = sphi 0, %s24
    %s18 = sphi 0, %s16
    %s19 = sphi 0, %s17
    %s20 = sphi 0, %s18
    %s21 = sphi 0, %s19
    %s29 = sphi 0, %s29
    %s31 = sphi 0, %s29
    %s32 = sphi 0, %s31
    %s46 = sphi 0, %s32
    %s50 = sphi 0, %s50
    %s52 = sphi 0, %s50
    %s53 = sphi 0, %s52
    %s67 = sphi 0, %s53
    %s75 = sphi 0, %s77
    %s78 = sphi 0, %s75
    %s79 = sphi 0, %s78
    %s95 = sphi 0, %s79
    %s103 = sphi 0, %s105
    %s106 = sphi 0, %s103
    %s107 = sphi 0, %s106
    %s123 = sphi 0, %s107
  $region4: #{cnn_halver_forward.1} parent=0 // loop_header_branch
    %12 = sbr.rel (%p10) target = $region8
  $region5: #{cnn_halver_forward.1} parent=0 // loop_body
    %s14 = ssub.s32 %s9, 1
    %s15 = ssub.s32 %s9, 2
    %s22 = sadd.s32 1, %s17
    %p23 = scmp.ge.s32.totalorder %s22, 1
    %s24 = scalar_select %p23, 0, %s22
    %s25 = sadd.s32 1, %s16
    %s26 = scalar_select %p23, %s25, %s16
    %p27 = scmp.ge.s32.totalorder %s26, 2
    %s28 = scalar_select %p27, 0, %s26
    %s30 = sadd.s32 %s29, 1
    %p33 = scmp.eq.s32.totalorder %s9, 1
    %p34 = scmp.ne.s32.totalorder %s29, %s31
    %p35 = scmp.eq.s32.totalorder %s9, 0
    %p36 = por %p34, %p35
    %p37 = scmp.ne.s32.totalorder %s29, %s31
    %p38 = scmp.eq.s32.totalorder %s14, 1
    %p39 = por %p37, %p38
    %p40 = scmp.ne.s32.totalorder %s31, %s32
    %p41 = scmp.eq.s32.totalorder %s14, 0
    %p42 = por %p40, %p41
    %p43 = scmp.ne.s32.totalorder %s31, %s32
    %p44 = scmp.eq.s32.totalorder %s15, 1
    %p45 = por %p43, %p44
    %p47 = scmp.ne.s32.totalorder %s32, %s46
    %p48 = scmp.eq.s32.totalorder %s15, 0
    %p49 = por %p47, %p48
    %s51 = sadd.s32 %s50, 1
    %p54 = scmp.eq.s32.totalorder %s9, 1
    %p55 = scmp.ne.s32.totalorder %s50, %s52
    %p56 = scmp.eq.s32.totalorder %s9, 0
    %p57 = por %p55, %p56
    %p58 = scmp.ne.s32.totalorder %s50, %s52
    %p59 = scmp.eq.s32.totalorder %s14, 1
    %p60 = por %p58, %p59
    %p61 = scmp.ne.s32.totalorder %s52, %s53
    %p62 = scmp.eq.s32.totalorder %s14, 0
    %p63 = por %p61, %p62
    %p64 = scmp.ne.s32.totalorder %s52, %s53
    %p65 = scmp.eq.s32.totalorder %s15, 1
    %p66 = por %p64, %p65
    %p68 = scmp.ne.s32.totalorder %s53, %s67
    %p69 = scmp.eq.s32.totalorder %s15, 0
    %p70 = por %p68, %p69
    %s71 = ssub.s32 %s16, %s28
    %s72 = ssub.s32 %s17, %s24
    %s73 = sor.u32 %s71, %s72
    %p74 = scmp.eq.s32.totalorder %s73, 0
    %s76 = sadd.s32 %s75, 1
    %s77 = scalar_select %p74, %s75, %s76
    %p80 = pneg %p74
    %p81 = scmp.eq.s32.totalorder %s9, 1
    %p82 = por %p80, %p81
    %p83 = scmp.ne.s32.totalorder %s75, %s78
    %p84 = scmp.eq.s32.totalorder %s9, 0
    %p85 = por %p83, %p84
    %p86 = scmp.ne.s32.totalorder %s75, %s78
    %p87 = scmp.eq.s32.totalorder %s14, 1
    %p88 = por %p86, %p87
    %p89 = scmp.ne.s32.totalorder %s78, %s79
    %p90 = scmp.eq.s32.totalorder %s14, 0
    %p91 = por %p89, %p90
    %p92 = scmp.ne.s32.totalorder %s78, %s79
    %p93 = scmp.eq.s32.totalorder %s15, 1
    %p94 = por %p92, %p93
    %p96 = scmp.ne.s32.totalorder %s79, %s95
    %p97 = scmp.eq.s32.totalorder %s15, 0
    %p98 = por %p96, %p97
    %s99 = ssub.s32 %s16, %s28
    %s100 = ssub.s32 %s17, %s24
    %s101 = sor.u32 %s99, %s100
    %p102 = scmp.eq.s32.totalorder %s101, 0
    %s104 = sadd.s32 %s103, 1
    %s105 = scalar_select %p102, %s103, %s104
    %p108 = pneg %p102
    %p109 = scmp.eq.s32.totalorder %s9, 1
    %p110 = por %p108, %p109
    %p111 = scmp.ne.s32.totalorder %s103, %s106
    %p112 = scmp.eq.s32.totalorder %s9, 0
    %p113 = por %p111, %p112
    %p114 = scmp.ne.s32.totalorder %s103, %s106
    %p115 = scmp.eq.s32.totalorder %s14, 1
    %p116 = por %p114, %p115
    %p117 = scmp.ne.s32.totalorder %s106, %s107
    %p118 = scmp.eq.s32.totalorder %s14, 0
    %p119 = por %p117, %p118
    %p120 = scmp.ne.s32.totalorder %s106, %s107
    %p121 = scmp.eq.s32.totalorder %s15, 1
    %p122 = por %p120, %p121
    %p124 = scmp.ne.s32.totalorder %s107, %s123
    %p125 = scmp.eq.s32.totalorder %s15, 0
    %p126 = por %p124, %p125
    %p127 = scmp.le.s32.totalorder 1, %s9
    %p128 = scmp.lt.s32.totalorder %s9, 3
    %p129 = pnand %p127, %p128
    %p130 = pneg %p129
    // Predicated region
    $region9: #{cnn_halver_forward.1} parent=5 // pred_check
      _
    $region10: #{cnn_halver_forward.1} parent=5 // pred_check_branch
      %132 = sbr.rel (%p129) target = $region12
    $region11: #{cnn_halver_forward.1} parent=5 // pred_region
      %s133 = ssub.s32 %s9, 1
      // Predicated region
      $region13: #{cnn_halver_forward.1} parent=11 // pred_check
        %p134 = pneg %p42
      $region14: #{cnn_halver_forward.1} parent=11 // pred_check_branch
        %136 = sbr.rel (%p134) target = $region16
      $region15: #{cnn_halver_forward.1} parent=11 // pred_region
        _
      $region16: #{cnn_halver_forward.1} parent=11 // pred_fallthru
        _
      // Predicated region
      $region17: #{cnn_halver_forward.1} parent=11 // pred_check
        %p137 = pneg %p63
      $region18: #{cnn_halver_forward.1} parent=11 // pred_check_branch
        %139 = sbr.rel (%p137) target = $region20
      $region19: #{cnn_halver_forward.1} parent=11 // pred_region
        _
      $region20: #{cnn_halver_forward.1} parent=11 // pred_fallthru
        _
    $region12: #{cnn_halver_forward.1} parent=5 // pred_fallthru
      _
    %p140 = scmp.lt.s32.totalorder %s9, 2
    // Predicated region
    $region21: #{cnn_halver_forward.1} parent=5 // pred_check
      %p141 = pneg %p140
    $region22: #{cnn_halver_forward.1} parent=5 // pred_check_branch
      %143 = sbr.rel (%p141) target = $region24
    $region23: #{cnn_halver_forward.1} parent=5 // pred_region
      // Predicated region
      $region25: #{cnn_halver_forward.1} parent=23 // pred_check
        %p144 = pneg %p85
      $region26: #{cnn_halver_forward.1} parent=23 // pred_check_branch
        %146 = sbr.rel (%p144) target = $region28
      $region27: #{cnn_halver_forward.1} parent=23 // pred_region
        %p147 = scmp.lt.s32.totalorder %s16, 1
        %s148 = scalar_select %p147, %s16, 1
        %p149 = scmp.lt.s32.totalorder %s17, 0
        %s150 = scalar_select %p149, %s17, 0
        %s151 = smul.addr %s148, 8
        %s152 = sadd.s32 %s150, %s151
        %s153 = smul.addr %s152, 4
        %s154 = scalar_lea.vmem %s2, %s153
      $region28: #{cnn_halver_forward.1} parent=23 // pred_fallthru
        _
    $region24: #{cnn_halver_forward.1} parent=5 // pred_fallthru
      _
    %p155 = scmp.le.s32.totalorder 1, %s9
    %p156 = scmp.lt.s32.totalorder %s9, 3
    %p157 = pnand %p155, %p156
    %p158 = pneg %p157
    // Predicated region
    $region29: #{cnn_halver_forward.1} parent=5 // pred_check
      _
    $region30: #{cnn_halver_forward.1} parent=5 // pred_check_branch
      %160 = sbr.rel (%p157) target = $region32
    $region31: #{cnn_halver_forward.1} parent=5 // pred_region
      %s161 = ssub.s32 %s9, 1
      %p162 = pneg %p42
      %p163 = pneg %p39
      %p164 = pneg %p63
      %p165 = pneg %p60
      %p166 = scmp.lt.s32.totalorder %s18, 1
      %s167 = scalar_select %p166, %s18, 1
      %p168 = scmp.lt.s32.totalorder %s19, 0
      %s169 = scalar_select %p168, %s19, 0
      %s170 = smul.addr %s167, 8
      %s171 = sadd.s32 %s169, %s170
      %s172 = smul.addr %s171, 4
      %s173 = scalar_lea.vmem %s2, %s172
      %p174 = pneg %p91
      %p175 = pneg %p88
      %p176 = pneg %p119
      %p177 = pneg %p116
      %p178 = scmp.lt.s32.totalorder %s18, 1
      %s179 = scalar_select %p178, %s18, 1
      %p180 = scmp.lt.s32.totalorder %s19, 0
      %s181 = scalar_select %p180, %s19, 0
      %s182 = sadd.s32 %s181, %s179
      %s183 = smul.addr %s182, 8
      %s184 = scalar_lea.vmem %s3, %s183
      %p185 = scmp.lt.s32.totalorder %s18, 1
      %s186 = scalar_select %p185, %s18, 1
      %p187 = scmp.lt.s32.totalorder %s19, 0
      %s188 = scalar_select %p187, %s19, 0
      %s189 = smul.addr %s186, 8
      %s190 = sadd.s32 %s188, %s189
      %s191 = smul.addr %s190, 4
      %s192 = scalar_lea.vmem %s2, %s191
      %p193 = scmp.lt.s32.totalorder %s18, 1
      %s194 = scalar_select %p193, %s18, 1
      %p195 = scmp.lt.s32.totalorder %s19, 0
      %s196 = scalar_select %p195, %s19, 0
      %s197 = sadd.s32 %s196, %s194
      %s198 = smul.addr %s197, 8
      %s199 = scalar_lea.vmem %s3, %s198
      %v201 = vld [vmem:[%s0] sm:$0xf]
      %v202 = vld [vmem:[%s192] sm:$0xf]
      %v203 = vld [vmem:[%s192 + $0x4] sm:$0xf]
      %v204 = vld [vmem:[%s192 + $0x8] sm:$0xf]
      %v205 = vld [vmem:[%s192 + $0xc] sm:$0xf]
      %v206 = vld [vmem:[%s192 + $0x10] sm:$0xf]
      %v207 = vld [vmem:[%s192 + $0x14] sm:$0xf]
      %v208 = vld [vmem:[%s192 + $0x18] sm:$0xf]
      %v209 = vld [vmem:[%s192 + $0x1c] sm:$0xf]
      %v210 = vld [vmem:[%s1] sm:$0xff]
      %212 = vset.pattern.permute.xlu0 0
      %213 = vperm.xlu0 %212, %v210
      %v214 = vpop.permute.xlu0 %213
      %v224 = vunpack.c.l.b16 %v202
      %v225 = vunpack.c.l.b16 %v203
      %v226 = vunpack.c.l.b16 %v204
      %v227 = vunpack.c.l.b16 %v205
      %v228 = vunpack.c.l.b16 %v206
      %v229 = vunpack.c.l.b16 %v207
      %v230 = vunpack.c.l.b16 %v208
      %v231 = vunpack.c.l.b16 %v209
      %v232 = vpack.c.b16 %v225, %v224
      %v233 = vpack.c.b16 %v227, %v226
      %v234 = vpack.c.b16 %v229, %v228
      %v235 = vpack.c.b16 %v231, %v230
      %vm240 = vcmask 523264
      %v242 = vsel %vm240, %v201, 0
      %244 = vmatprep.subr.bf16.mxu0 0
      %245 = vmatpush1.bf16.msra.mxu0 %v232
      %246 = vmatprep.subr.bf16.mxu0 0
      %247 = vmatpush1.bf16.msra.mxu0 %v233
      %248 = vmatprep.subr.bf16.mxu0 0
      %249 = vmatpush1.bf16.msra.mxu0 %v234
      %250 = vmatprep.subr.bf16.mxu0 0
      %251 = vmatpush1.bf16.msra.mxu0 %v235
      %252 = vmatprep.subr.bf16.mxu0 0
      %253 = vmatpush1.bf16.msra.mxu0 0
      %254 = vmatprep.subr.bf16.mxu0 0
      %255 = vmatpush1.bf16.msra.mxu0 0
      %256 = vmatprep.subr.bf16.mxu0 0
      %257 = vmatpush1.bf16.msra.mxu0 0
      %258 = vmatprep.subr.bf16.mxu0 0
      %259 = vmatpush1.bf16.msra.mxu0 0
      %260 = vmatprep.subr.bf16.mxu0 0
      %261 = vmatpush1.bf16.msra.mxu0 0
      %262 = vmatprep.subr.bf16.mxu0 0
      %263 = vmatpush1.bf16.msra.mxu0 0
      %264 = vmatprep.subr.bf16.mxu0 0
      %265 = vmatpush1.bf16.msra.mxu0 0
      %266 = vmatprep.subr.bf16.mxu0 0
      %267 = vmatpush1.bf16.msra.mxu0 0
      %268 = vmatprep.subr.bf16.mxu0 0
      %269 = vmatpush1.bf16.msra.mxu0 0
      %270 = vmatprep.subr.bf16.mxu0 0
      %271 = vmatpush1.bf16.msra.mxu0 0
      %272 = vmatprep.subr.bf16.mxu0 0
      %273 = vmatpush1.bf16.msra.mxu0 0
      %274 = vmatprep.subr.bf16.mxu0 0
      %275 = vmatpush1.bf16.msra.mxu0 0
      %276 = vmatprep.mubr.bf16.mxu0 0
      %277 = vmatmul.mubr.bf16.gmra.mrb[0].mxu0 %v242
      %v278 = vpop.f32.mrb[0].mxu0
      %v279 = vadd.f32 %v214, %v278
      %v280 = vpop.f32.mrb[0].mxu0
      %v281 = vpop.f32.mrb[0].mxu0
      %v282 = vpop.f32.mrb[0].mxu0
      %283 = vdwg.mxu0
      %vm284 = vcmp.ge.f32.partialorder %v279, 0.0
      %v285 = vmul.f32 %v279, 0.01
      %v286 = vsel %vm284, %v279, %v285
      %287 = vst [vmem:[%s199] sm:$0xff] %v286
      %p288 = scmp.lt.s32.totalorder %s18, 1
      %s289 = scalar_select %p288, %s18, 1
      %p290 = scmp.lt.s32.totalorder %s19, 0
      %s291 = scalar_select %p290, %s19, 0
      %s292 = sadd.s32 %s291, %s289
      %s293 = smul.addr %s292, 8
      %s294 = scalar_lea.vmem %s3, %s293
      // Predicated region
      $region33: #{cnn_halver_forward.1} parent=31 // pred_check
        %p295 = pneg %p116
      $region34: #{cnn_halver_forward.1} parent=31 // pred_check_branch
        %297 = sbr.rel (%p295) target = $region36
      $region35: #{cnn_halver_forward.1} parent=31 // pred_region
        _
      $region36: #{cnn_halver_forward.1} parent=31 // pred_fallthru
        _
    $region32: #{cnn_halver_forward.1} parent=5 // pred_fallthru
      _
    %p298 = scmp.le.s32.totalorder 2, %s9
    // Predicated region
    $region37: #{cnn_halver_forward.1} parent=5 // pred_check
      %p299 = pneg %p298
    $region38: #{cnn_halver_forward.1} parent=5 // pred_check_branch
      %301 = sbr.rel (%p299) target = $region40
    $region39: #{cnn_halver_forward.1} parent=5 // pred_region
      %s302 = ssub.s32 %s9, 2
      // Predicated region
      $region41: #{cnn_halver_forward.1} parent=39 // pred_check
        %p303 = pneg %p122
      $region42: #{cnn_halver_forward.1} parent=39 // pred_check_branch
        %305 = sbr.rel (%p303) target = $region44
      $region43: #{cnn_halver_forward.1} parent=39 // pred_region
        %p306 = scmp.lt.s32.totalorder %s20, 1
        %s307 = scalar_select %p306, %s20, 1
        %p308 = scmp.lt.s32.totalorder %s21, 0
        %s309 = scalar_select %p308, %s21, 0
        %s310 = sadd.s32 %s309, %s307
        %s311 = smul.addr %s310, 8
        %s312 = scalar_lea.vmem %s3, %s311
      $region44: #{cnn_halver_forward.1} parent=39 // pred_fallthru
        _
    $region40: #{cnn_halver_forward.1} parent=5 // pred_fallthru
      _
  $region6: #{cnn_halver_forward.1} parent=0 // loop_footer
    %s13 = sadd.s32 1, %s9
  $region7: #{cnn_halver_forward.1} parent=0 // loop_footer_branch
    %8 = sbr.rel target = $region3
  $region8: #{cnn_halver_forward.1} parent=0 // loop_exit
    _

</llo_original>
